<compile_context>
chip_gen: v7x
topology: tpu7x:2x2x1
jax: 0.10.0
libtpu: 0.0.40
codegen_flags: <defaults>
</compile_context>

<pallas_src>
import math

import jax
import jax.numpy as jnp
from jax.experimental import pallas as pl
from jax.experimental.pallas import tpu as pltpu

EPS = 1e-6
LANE = 128
SUBLANE = 8


def _dsc_kernel(pred_ref, tgt_ref, inter_out_ref, denom_out_ref,
                inter_acc, denom_acc):
    k = pl.program_id(1)

    @pl.when(k == 0)
    def _():
        inter_acc[...] = jnp.zeros_like(inter_acc)
        denom_acc[...] = jnp.zeros_like(denom_acc)

    p = pred_ref[...].astype(jnp.float32)
    t = tgt_ref[...].astype(jnp.float32)

    # Pure elementwise accumulation in the steady state (no per-tile XLU work).
    inter_acc[...] += p * t
    denom_acc[...] += p + t

    @pl.when(k == pl.num_programs(1) - 1)
    def _():
        # One reduction over the row axis per split; lane axis stays dense.
        inter_out_ref[0, :, :] = jnp.sum(inter_acc[...], axis=1)
        denom_out_ref[0, :, :] = jnp.sum(denom_acc[...], axis=1)


def dsc_loss(pred, target, *, block_budget_bytes=2 * 1024 * 1024):
    """Dice loss matching the PyTorch DSC_loss.forward semantics.

    pred, target: (B, C, H, W) arrays (any float dtype). Returns scalar f32.
    """
    assert pred.shape == target.shape
    b = pred.shape[0]
    n = math.prod(pred.shape[1:])

    pred2 = pred.reshape(b, n)
    tgt2 = target.reshape(b, n)

    # --- Tiling: lane-dense (B, R, 128) layout, rows tiled by VMEM budget ---
    r_raw = pl.cdiv(n, LANE)
    # rows_per_tile from a per-block byte budget (counted at f32 width).
    rows_cap = max(SUBLANE,
                   (block_budget_bytes // (b * LANE * 4)) // SUBLANE * SUBLANE)
    r_raw_rounded = pl.cdiv(r_raw, SUBLANE) * SUBLANE
    rows_per_tile = min(rows_cap, r_raw_rounded)

    tiles = pl.cdiv(r_raw, rows_per_tile)
    n_splits = 2 if tiles >= 2 else 1        # lets v7x megacore split the work
    tiles_per_split = pl.cdiv(tiles, n_splits)
    r_pad = rows_per_tile * tiles_per_split * n_splits
    n_pad = r_pad * LANE

    if n_pad != n:
        # Zero padding is exact: contributes 0 to both intersection and denom.
        pred2 = jnp.pad(pred2, ((0, 0), (0, n_pad - n)))
        tgt2 = jnp.pad(tgt2, ((0, 0), (0, n_pad - n)))

    pred3 = pred2.reshape(b, r_pad, LANE)
    tgt3 = tgt2.reshape(b, r_pad, LANE)

    in_map = lambda s, k: (0, s * tiles_per_split + k, 0)
    out_map = lambda s, k: (s, 0, 0)

    itemsize = jnp.dtype(pred.dtype).itemsize
    cost = pl.CostEstimate(
        flops=3 * b * n,
        transcendentals=0,
        bytes_accessed=2 * b * n * itemsize + 2 * n_splits * b * LANE * 4,
    )

    inter_part, denom_part = pl.pallas_call(
        _dsc_kernel,
        out_shape=(
            jax.ShapeDtypeStruct((n_splits, b, LANE), jnp.float32),
            jax.ShapeDtypeStruct((n_splits, b, LANE), jnp.float32),
        ),
        grid_spec=pltpu.PrefetchScalarGridSpec(
            num_scalar_prefetch=0,
            grid=(n_splits, tiles_per_split),
            in_specs=[
                pl.BlockSpec((b, rows_per_tile, LANE), in_map),
                pl.BlockSpec((b, rows_per_tile, LANE), in_map),
            ],
            out_specs=[
                pl.BlockSpec((1, b, LANE), out_map),
                pl.BlockSpec((1, b, LANE), out_map),
            ],
            scratch_shapes=[
                pltpu.VMEM((b, rows_per_tile, LANE), jnp.float32),
                pltpu.VMEM((b, rows_per_tile, LANE), jnp.float32),
            ],
        ),
        compiler_params=pltpu.CompilerParams(
            dimension_semantics=("parallel", "arbitrary"),
            vmem_limit_bytes=32 * 1024 * 1024,
        ),
        cost_estimate=cost,
    )(pred3, tgt3)

    # Tiny epilogue in the wrapper: combine per-split lane-wise partial sums.
    inter = jnp.sum(inter_part, axis=(0, 2))   # (B,)
    denom = jnp.sum(denom_part, axis=(0, 2))   # (B,)
    dsc = (2.0 * inter + EPS) / (denom + EPS)
    return 1.0 - jnp.sum(dsc) / float(b)


def dsc_loss_ref(pred, target):
    b = pred.shape[0]
    p = pred.reshape(b, -1).astype(jnp.float32)
    t = target.reshape(b, -1).astype(jnp.float32)
    dsc = (2.0 * jnp.sum(p * t, axis=1) + EPS) / (jnp.sum(p + t, axis=1) + EPS)
    return 1.0 - jnp.sum(dsc) / float(b)


if __name__ == "__main__":
    key = jax.random.PRNGKey(0)
    k1, k2 = jax.random.split(key)
    B, C, H, W = 2, 4, 16, 16
    pred = jax.nn.sigmoid(jax.random.normal(k1, (B, C, H, W), dtype=jnp.float32))
    target = (jax.random.uniform(k2, (B, C, H, W)) > 0.5).astype(jnp.float32)

    loss = jax.block_until_ready(dsc_loss(pred, target))
    ref = jax.block_until_ready(dsc_loss_ref(pred, target))
    assert jnp.allclose(loss, ref, atol=1e-5, rtol=1e-5), (loss, ref)

    # Also exercise a non-tile-multiple / multi-tile / multi-split shape.
    k3, k4 = jax.random.split(k2)
    B2, C2, H2, W2 = 2, 3, 200, 200   # N = 120000, not a multiple of 128
    pred2 = jax.nn.sigmoid(jax.random.normal(k3, (B2, C2, H2, W2), dtype=jnp.float32))
    target2 = (jax.random.uniform(k4, (B2, C2, H2, W2)) > 0.5).astype(jnp.float32)
    loss2 = jax.block_until_ready(
        dsc_loss(pred2, target2, block_budget_bytes=64 * 1024))
    ref2 = jax.block_until_ready(dsc_loss_ref(pred2, target2))
    assert jnp.allclose(loss2, ref2, atol=1e-5, rtol=1e-5), (loss2, ref2)

    print("KERNEL_OK")
</pallas_src>

<mosaic_0001>
module attributes {stable_mosaic.version = 11 : i64} {
  func.func @_dsc_kernel(%arg0: i32, %arg1: i32, %arg2: memref<2x8x128xf32, #tpu.memory_space<vmem>>, %arg3: memref<2x8x128xf32, #tpu.memory_space<vmem>>, %arg4: memref<1x2x128xf32, #tpu.memory_space<vmem>>, %arg5: memref<1x2x128xf32, #tpu.memory_space<vmem>>, %arg6: memref<2x8x128xf32, #tpu.memory_space<vmem>>, %arg7: memref<2x8x128xf32, #tpu.memory_space<vmem>>) attributes {dimension_semantics = [#tpu.dimension_semantics<parallel>, #tpu.dimension_semantics<arbitrary>], iteration_bounds = array<i64: 1, 1>, scalar_prefetch = 0 : i64, scratch_operands = 2 : i64, tpu.core_type = #tpu.core_type<tc>, window_params = [{transform_indices = @transform_0, window_bounds = array<i64: 2, 8, 128>}, {transform_indices = @transform_1, window_bounds = array<i64: 2, 8, 128>}, {transform_indices = @transform_2, window_bounds = array<i64: 1, 2, 128>}, {transform_indices = @transform_3, window_bounds = array<i64: 1, 2, 128>}]} {
    %c0_i32 = arith.constant 0 : i32
    %0 = arith.cmpi eq, %arg1, %c0_i32 : i32
    %1 = arith.extui %0 : i1 to i32
    %c0_i32_0 = arith.constant 0 : i32
    %2 = arith.cmpi ne, %1, %c0_i32_0 : i32
    scf.if %2 {
      %cst = arith.constant 0.000000e+00 : f32
      %16 = vector.broadcast %cst : f32 to vector<2x8x128xf32>
      %c0_20 = arith.constant 0 : index
      %c0_21 = arith.constant 0 : index
      %c0_22 = arith.constant 0 : index
      %17 = vector.load %arg6[%c0_20, %c0_21, %c0_22] : memref<2x8x128xf32, #tpu.memory_space<vmem>>, vector<2x8x128xf32>
      tpu.vector_store %arg6[%c0_20, %c0_21, %c0_22], %16 {strides = array<i32>} : memref<2x8x128xf32, #tpu.memory_space<vmem>>, vector<2x8x128xf32>,
      %cst_23 = arith.constant 0.000000e+00 : f32
      %18 = vector.broadcast %cst_23 : f32 to vector<2x8x128xf32>
      %c0_24 = arith.constant 0 : index
      %c0_25 = arith.constant 0 : index
      %c0_26 = arith.constant 0 : index
      %19 = vector.load %arg7[%c0_24, %c0_25, %c0_26] : memref<2x8x128xf32, #tpu.memory_space<vmem>>, vector<2x8x128xf32>
      tpu.vector_store %arg7[%c0_24, %c0_25, %c0_26], %18 {strides = array<i32>} : memref<2x8x128xf32, #tpu.memory_space<vmem>>, vector<2x8x128xf32>,
    } else {
    }
    %c0 = arith.constant 0 : index
    %c0_1 = arith.constant 0 : index
    %c0_2 = arith.constant 0 : index
    %3 = vector.load %arg2[%c0, %c0_1, %c0_2] : memref<2x8x128xf32, #tpu.memory_space<vmem>>, vector<2x8x128xf32>
    %c0_3 = arith.constant 0 : index
    %c0_4 = arith.constant 0 : index
    %c0_5 = arith.constant 0 : index
    %4 = vector.load %arg3[%c0_3, %c0_4, %c0_5] : memref<2x8x128xf32, #tpu.memory_space<vmem>>, vector<2x8x128xf32>
    %c0_6 = arith.constant 0 : index
    %c0_7 = arith.constant 0 : index
    %c0_8 = arith.constant 0 : index
    %5 = vector.load %arg6[%c0_6, %c0_7, %c0_8] : memref<2x8x128xf32, #tpu.memory_space<vmem>>, vector<2x8x128xf32>
    %6 = arith.mulf %3, %4 : vector<2x8x128xf32>
    %7 = arith.addf %5, %6 : vector<2x8x128xf32>
    %c0_9 = arith.constant 0 : index
    %c0_10 = arith.constant 0 : index
    %c0_11 = arith.constant 0 : index
    %8 = vector.load %arg6[%c0_9, %c0_10, %c0_11] : memref<2x8x128xf32, #tpu.memory_space<vmem>>, vector<2x8x128xf32>
    tpu.vector_store %arg6[%c0_9, %c0_10, %c0_11], %7 {strides = array<i32>} : memref<2x8x128xf32, #tpu.memory_space<vmem>>, vector<2x8x128xf32>,
    %c0_12 = arith.constant 0 : index
    %c0_13 = arith.constant 0 : index
    %c0_14 = arith.constant 0 : index
    %9 = vector.load %arg7[%c0_12, %c0_13, %c0_14] : memref<2x8x128xf32, #tpu.memory_space<vmem>>, vector<2x8x128xf32>
    %10 = arith.addf %3, %4 : vector<2x8x128xf32>
    %11 = arith.addf %9, %10 : vector<2x8x128xf32>
    %c0_15 = arith.constant 0 : index
    %c0_16 = arith.constant 0 : index
    %c0_17 = arith.constant 0 : index
    %12 = vector.load %arg7[%c0_15, %c0_16, %c0_17] : memref<2x8x128xf32, #tpu.memory_space<vmem>>, vector<2x8x128xf32>
    tpu.vector_store %arg7[%c0_15, %c0_16, %c0_17], %11 {strides = array<i32>} : memref<2x8x128xf32, #tpu.memory_space<vmem>>, vector<2x8x128xf32>,
    %c0_i32_18 = arith.constant 0 : i32
    %13 = arith.cmpi eq, %arg1, %c0_i32_18 : i32
    %14 = arith.extui %13 : i1 to i32
    %c0_i32_19 = arith.constant 0 : i32
    %15 = arith.cmpi ne, %14, %c0_i32_19 : i32
    scf.if %15 {
      %c0_20 = arith.constant 0 : index
      %c0_21 = arith.constant 0 : index
      %c0_22 = arith.constant 0 : index
      %16 = vector.load %arg6[%c0_20, %c0_21, %c0_22] : memref<2x8x128xf32, #tpu.memory_space<vmem>>, vector<2x8x128xf32>
      %cst = arith.constant dense<0.000000e+00> : vector<2x128xf32>
      %17 = vector.multi_reduction <add>, %16, %cst [1] : vector<2x8x128xf32> to vector<2x128xf32>
      %c0_23 = arith.constant 0 : index
      %c0_24 = arith.constant 0 : index
      %c0_25 = arith.constant 0 : index
      %18 = vector.load %arg4[%c0_23, %c0_24, %c0_25] : memref<1x2x128xf32, #tpu.memory_space<vmem>>, vector<1x2x128xf32>
      %19 = vector.shape_cast %18 : vector<1x2x128xf32> to vector<2x128xf32>
      %20 = vector.shape_cast %17 : vector<2x128xf32> to vector<1x2x128xf32>
      tpu.vector_store %arg4[%c0_23, %c0_24, %c0_25], %20 {strides = array<i32>} : memref<1x2x128xf32, #tpu.memory_space<vmem>>, vector<1x2x128xf32>,
      %c0_26 = arith.constant 0 : index
      %c0_27 = arith.constant 0 : index
      %c0_28 = arith.constant 0 : index
      %21 = vector.load %arg7[%c0_26, %c0_27, %c0_28] : memref<2x8x128xf32, #tpu.memory_space<vmem>>, vector<2x8x128xf32>
      %cst_29 = arith.constant dense<0.000000e+00> : vector<2x128xf32>
      %22 = vector.multi_reduction <add>, %21, %cst_29 [1] : vector<2x8x128xf32> to vector<2x128xf32>
      %c0_30 = arith.constant 0 : index
      %c0_31 = arith.constant 0 : index
      %c0_32 = arith.constant 0 : index
      %23 = vector.load %arg5[%c0_30, %c0_31, %c0_32] : memref<1x2x128xf32, #tpu.memory_space<vmem>>, vector<1x2x128xf32>
      %24 = vector.shape_cast %23 : vector<1x2x128xf32> to vector<2x128xf32>
      %25 = vector.shape_cast %22 : vector<2x128xf32> to vector<1x2x128xf32>
      tpu.vector_store %arg5[%c0_30, %c0_31, %c0_32], %25 {strides = array<i32>} : memref<1x2x128xf32, #tpu.memory_space<vmem>>, vector<1x2x128xf32>,
    } else {
    }
    return
  }
  func.func @transform_0(%arg0: i32, %arg1: i32) -> (i32, i32, i32) {
    %c1_i32 = arith.constant 1 : i32
    %0 = arith.muli %arg0, %c1_i32 : i32
    %1 = arith.addi %0, %arg1 : i32
    %c0_i32 = arith.constant 0 : i32
    %c0_i32_0 = arith.constant 0 : i32
    %c0_i32_1 = arith.constant 0 : i32
    return %c0_i32, %1, %c0_i32_0 : i32, i32, i32
  }
  func.func @transform_1(%arg0: i32, %arg1: i32) -> (i32, i32, i32) {
    %c1_i32 = arith.constant 1 : i32
    %0 = arith.muli %arg0, %c1_i32 : i32
    %1 = arith.addi %0, %arg1 : i32
    %c0_i32 = arith.constant 0 : i32
    %c0_i32_0 = arith.constant 0 : i32
    %c0_i32_1 = arith.constant 0 : i32
    return %c0_i32, %1, %c0_i32_0 : i32, i32, i32
  }
  func.func @transform_2(%arg0: i32, %arg1: i32) -> (i32, i32, i32) {
    %c0_i32 = arith.constant 0 : i32
    %c0_i32_0 = arith.constant 0 : i32
    %c0_i32_1 = arith.constant 0 : i32
    return %arg0, %c0_i32, %c0_i32_0 : i32, i32, i32
  }
  func.func @transform_3(%arg0: i32, %arg1: i32) -> (i32, i32, i32) {
    %c0_i32 = arith.constant 0 : i32
    %c0_i32_0 = arith.constant 0 : i32
    %c0_i32_1 = arith.constant 0 : i32
    return %arg0, %c0_i32, %c0_i32_0 : i32, i32, i32
  }
}

</mosaic_0001>

<llo_original>
// kernel: tpu_custom_call.1
$region0: #{tpu_custom_call.1}
  #allocation0 [shape = 'u32[]', space=smem, size = 0x4, offset = 0x4, fixed_abs, tag = 'smem constant byte address 0x4 - core index']
  #allocation1 [shape = 'u32[144,128]{1,0:T(1,128)}', space=vmem, size = 0x12000, scoped, tag = 'internal scratch']
  #allocation2 [shape = 'f32[2,8,128]{2,1,0:T(8,128)}', space=vmem, size = 0x2000, scoped, tag = 'scratch operand']
  #allocation3 [shape = 'f32[2,8,128]{2,1,0:T(8,128)}', space=vmem, size = 0x2000, scoped, tag = 'scratch operand']
  %s0 = inlined_call_operand.hbm [shape: f32[2,8,128], index: 0, kind: input, shape index: {}]
  %s1 = inlined_call_operand.hbm [shape: f32[2,8,128], index: 1, kind: input, shape index: {}]
  %s2 = inlined_call_operand.hbm [shape: f32[1,2,128], index: 2, kind: output, shape index: {0}]
  %s3 = inlined_call_operand.hbm [shape: f32[1,2,128], index: 3, kind: output, shape index: {1}]
  %4 = xla_tuple %s2, %s3
  %s5 = sld [smem:[#allocation0]]
  $region42: #{tpu_custom_call.1} parent=0
    _
  %s7 = ssub.s32 1, %s5
  %s8 = scalar_select 0, %s7, %s5
  $region1: #{tpu_custom_call.1} parent=0
    #allocation4 [shape = 'u8[8192]{0}', space=vmem, size = 0x2000, scoped, tag = 'input window, operand 0, single buffered']
    #allocation5 [shape = 's32[1]{0}', space=sflag, size = 0x4, scoped, tag = 'scoped memory for tpu_custom_call.1']
    #allocation6 [shape = 's32[1]{0}', space=sflag, size = 0x4, scoped, tag = 'scoped memory for tpu_custom_call.1']
    #allocation7 [shape = 'u8[8192]{0}', space=vmem, size = 0x2000, scoped, tag = 'input window, operand 1, single buffered']
    #allocation8 [shape = 's32[1]{0}', space=sflag, size = 0x4, scoped, tag = 'scoped memory for tpu_custom_call.1']
    #allocation9 [shape = 'u8[1024]{0}', space=vmem, size = 0x400, scoped, tag = 'output window, operand 0, single buffered']
    #allocation10 [shape = 'u8[1024]{0}', space=vmem, size = 0x400, scoped, tag = 'output window, operand 1, single buffered']
    #allocation11 [shape = 's32[1]{0}', space=sflag, size = 0x4, scoped, tag = 'scoped memory for tpu_custom_call.1']
    %9 = vsyncpa [#allocation5], 0
    %10 = vsyncpa [#allocation8], 0
    %11 = vsyncpa [#allocation6], 0
    %12 = vsyncpa [#allocation11], 0
    // Predicated region
    $region2: #{tpu_custom_call.1} parent=1 // pred_check
      _
    $region3: #{tpu_custom_call.1} parent=1 // pred_check_branch
      %14 = sbr.rel (0) target = $region5
    $region4: #{tpu_custom_call.1} parent=1 // pred_region
      %s15 = sadd.s32 0, 0
      %s17 = ssub.s32 256, 256
      %18 = vsyncadd [#allocation5], %s17
      %s19 = smul.addr %s15, 128
      %s20 = scalar_lea.hbm %s0, %s19
      %s21 = sshll.u32 [#allocation4], 4
      %s22 = int_to_ptr.vmem [resolvable:$true] %s21
      %27 = dma.hbm_to_vmem [thread:$0]  %s20, 256, %s22, [#allocation5], 128, 128, 8
    $region5: #{tpu_custom_call.1} parent=1 // pred_fallthru
      _
    // Predicated region
    $region6: #{tpu_custom_call.1} parent=1 // pred_check
      _
    $region7: #{tpu_custom_call.1} parent=1 // pred_check_branch
      %29 = sbr.rel (0) target = $region9
    $region8: #{tpu_custom_call.1} parent=1 // pred_region
      %s30 = sadd.s32 0, 0
      %s32 = ssub.s32 256, 256
      %33 = vsyncadd [#allocation8], %s32
      %s34 = smul.addr %s30, 128
      %s35 = scalar_lea.hbm %s1, %s34
      %s36 = sshll.u32 [#allocation7], 4
      %s37 = int_to_ptr.vmem [resolvable:$true] %s36
      %42 = dma.hbm_to_vmem [thread:$0]  %s35, 256, %s37, [#allocation8], 128, 128, 8
    $region9: #{tpu_custom_call.1} parent=1 // pred_fallthru
      _
    // Predicated region
    $region10: #{tpu_custom_call.1} parent=1 // pred_check
      _
    $region11: #{tpu_custom_call.1} parent=1 // pred_check_branch
      %44 = sbr.rel (0) target = $region13
    $region12: #{tpu_custom_call.1} parent=1 // pred_region
      %45 = dma.done [#allocation5], 256
    $region13: #{tpu_custom_call.1} parent=1 // pred_fallthru
      _
    // Predicated region
    $region14: #{tpu_custom_call.1} parent=1 // pred_check
      _
    $region15: #{tpu_custom_call.1} parent=1 // pred_check_branch
      %47 = sbr.rel (0) target = $region17
    $region16: #{tpu_custom_call.1} parent=1 // pred_region
      %48 = dma.done [#allocation8], 256
    $region17: #{tpu_custom_call.1} parent=1 // pred_fallthru
      _
    %s49 = sadd.s32 0, 0
    %s50 = sadd.s32 0, 0
    %p51 = scmp.eq.s32.totalorder 0, 0
    // Predicated region
    $region18: #{tpu_custom_call.1} parent=1 // pred_check
      %p52 = pneg %p51
    $region19: #{tpu_custom_call.1} parent=1 // pred_check_branch
      %54 = sbr.rel (%p52) target = $region21
    $region20: #{tpu_custom_call.1} parent=1 // pred_region
      %55 = vst [vmem:[#allocation2] sm:$0xff] 0.0
      %56 = vst [vmem:[#allocation2 + $0x8] sm:$0xff] 0.0
      %57 = vst [vmem:[#allocation3] sm:$0xff] 0.0
      %58 = vst [vmem:[#allocation3 + $0x8] sm:$0xff] 0.0
    $region21: #{tpu_custom_call.1} parent=1 // pred_fallthru
      _
    %v59 = vld [vmem:[#allocation4] sm:$0xff]
    %v60 = vld [vmem:[#allocation4 + $0x8] sm:$0xff]
    %v61 = vld [vmem:[#allocation7] sm:$0xff]
    %v62 = vld [vmem:[#allocation7 + $0x8] sm:$0xff]
    %v63 = vld [vmem:[#allocation2] sm:$0xff]
    %v64 = vld [vmem:[#allocation2 + $0x8] sm:$0xff]
    %v65 = vmul.f32 %v59, %v61
    %v66 = vmul.f32 %v60, %v62
    %v67 = vadd.f32 %v63, %v65
    %v68 = vadd.f32 %v64, %v66
    %69 = vst [vmem:[#allocation2] sm:$0xff] %v67
    %70 = vst [vmem:[#allocation2 + $0x8] sm:$0xff] %v68
    %v71 = vld [vmem:[#allocation3] sm:$0xff]
    %v72 = vld [vmem:[#allocation3 + $0x8] sm:$0xff]
    %v73 = vadd.f32 %v59, %v61
    %v74 = vadd.f32 %v60, %v62
    %v75 = vadd.f32 %v71, %v73
    %v76 = vadd.f32 %v72, %v74
    %77 = vst [vmem:[#allocation3] sm:$0xff] %v75
    %78 = vst [vmem:[#allocation3 + $0x8] sm:$0xff] %v76
    // Predicated region
    $region22: #{tpu_custom_call.1} parent=1 // pred_check
      %p79 = pneg %p51
    $region23: #{tpu_custom_call.1} parent=1 // pred_check_branch
      %81 = sbr.rel (%p79) target = $region25
    $region24: #{tpu_custom_call.1} parent=1 // pred_region
      %v82 = vld [vmem:[#allocation2] sm:$0xff]
      %v83 = vld [vmem:[#allocation2 + $0x8] sm:$0xff]
      %v84 = vrot.slane %v82, 4
      %v85 = vadd.f32 %v82, %v84
      %v86 = vrot.slane %v85, 2
      %v87 = vadd.f32 %v85, %v86
      %v88 = vrot.slane %v87, 1
      %v89 = vadd.f32 %v87, %v88
      %v90 = vrot.slane %v83, 4
      %v91 = vadd.f32 %v83, %v90
      %v92 = vrot.slane %v91, 2
      %v93 = vadd.f32 %v91, %v92
      %v94 = vrot.slane %v93, 1
      %v95 = vadd.f32 %v93, %v94
      %vm98 = vcmask 1041409
      %v99 = vsel %vm98, %v95, %v89
      %101 = vst [vmem:[#allocation9] sm:$0x3] %v99
      %v102 = vld [vmem:[#allocation3] sm:$0xff]
      %v103 = vld [vmem:[#allocation3 + $0x8] sm:$0xff]
      %v104 = vrot.slane %v102, 4
      %v105 = vadd.f32 %v102, %v104
      %v106 = vrot.slane %v105, 2
      %v107 = vadd.f32 %v105, %v106
      %v108 = vrot.slane %v107, 1
      %v109 = vadd.f32 %v107, %v108
      %v110 = vrot.slane %v103, 4
      %v111 = vadd.f32 %v103, %v110
      %v112 = vrot.slane %v111, 2
      %v113 = vadd.f32 %v111, %v112
      %v114 = vrot.slane %v113, 1
      %v115 = vadd.f32 %v113, %v114
      %v118 = vsel %vm98, %v115, %v109
      %120 = vst [vmem:[#allocation10] sm:$0x3] %v118
    $region25: #{tpu_custom_call.1} parent=1 // pred_fallthru
      _
    // Predicated region
    $region26: #{tpu_custom_call.1} parent=1 // pred_check
      _
    $region27: #{tpu_custom_call.1} parent=1 // pred_check_branch
      %122 = sbr.rel (0) target = $region29
    $region28: #{tpu_custom_call.1} parent=1 // pred_region
      %s124 = ssub.s32 32, 32
      %125 = vsyncadd [#allocation6], %s124
      %s127 = sshll.u32 [#allocation9], 4
      %s128 = int_to_ptr.vmem [resolvable:$true] %s127
      %130 = dma.vmem_to_hbm [thread:$0]  %s128, 32, %s2, [#allocation6]
    $region29: #{tpu_custom_call.1} parent=1 // pred_fallthru
      _
    // Predicated region
    $region30: #{tpu_custom_call.1} parent=1 // pred_check
      _
    $region31: #{tpu_custom_call.1} parent=1 // pred_check_branch
      %132 = sbr.rel (0) target = $region33
    $region32: #{tpu_custom_call.1} parent=1 // pred_region
      %s134 = ssub.s32 32, 32
      %135 = vsyncadd [#allocation11], %s134
      %s137 = sshll.u32 [#allocation10], 4
      %s138 = int_to_ptr.vmem [resolvable:$true] %s137
      %140 = dma.vmem_to_hbm [thread:$0]  %s138, 32, %s3, [#allocation11]
    $region33: #{tpu_custom_call.1} parent=1 // pred_fallthru
      _
    // Predicated region
    $region34: #{tpu_custom_call.1} parent=1 // pred_check
      _
    $region35: #{tpu_custom_call.1} parent=1 // pred_check_branch
      %142 = sbr.rel (0) target = $region37
    $region36: #{tpu_custom_call.1} parent=1 // pred_region
      %143 = dma.done [#allocation6], 32
    $region37: #{tpu_custom_call.1} parent=1 // pred_fallthru
      _
    // Predicated region
    $region38: #{tpu_custom_call.1} parent=1 // pred_check
      _
    $region39: #{tpu_custom_call.1} parent=1 // pred_check_branch
      %145 = sbr.rel (0) target = $region41
    $region40: #{tpu_custom_call.1} parent=1 // pred_region
      %146 = dma.done [#allocation11], 32
    $region41: #{tpu_custom_call.1} parent=1 // pred_fallthru
      _
    %147 = vsyncpa [#allocation5], 1
    %148 = vsyncpa [#allocation8], 1
    %149 = vsyncpa [#allocation6], 1
    %150 = vsyncpa [#allocation11], 1

</llo_original>
